<compile_context>
chip_gen: v5e
topology: v5e:2x2
jax: 0.10.0
libtpu: 0.0.40
codegen_flags: <defaults>
</compile_context>

<pallas_src>
import functools

import jax
import jax.numpy as jnp
from jax.experimental import pallas as pl
from jax.experimental.pallas import tpu as pltpu

_BN_EPS = 1e-5  # torch.nn.BatchNorm1d default


# ------------------------------ Pallas kernel ------------------------------ #

def _decoder_stack_kernel(bn_flags_ref,                     # SMEM [L] int32 (scalar prefetch)
                          x_ref, adj_ref,                   # [N, D], [N, N] (DMA'd once)
                          w1_ref, b1_ref, w2_ref, b2_ref,   # per-layer weight blocks
                          gamma_ref, beta_ref,              # per-BN-layer blocks
                          out_ref,                          # [N, D], written at last layer
                          h_ref):                           # VMEM scratch [N, D], carried
    l = pl.program_id(0)
    n_layers = pl.num_programs(0)

    # Load the input activation into the carried scratch at the first layer.
    @pl.when(l == 0)
    def _():
        h_ref[...] = x_ref[...]

    h = h_ref[...]
    # GINConv (eps=0, 'add' aggregation): (1 + 0) * x_i + sum_{j in N(i)} x_j
    agg = h + jnp.dot(adj_ref[...], h, preferred_element_type=jnp.float32)
    # MLP: Linear -> ReLU -> Linear
    z = jnp.dot(agg, w1_ref[0], preferred_element_type=jnp.float32) + b1_ref[0]
    z = jnp.maximum(z, 0.0)
    z = jnp.dot(z, w2_ref[0], preferred_element_type=jnp.float32) + b2_ref[0]
    # outer F.relu(conv(x))
    z = jnp.maximum(z, 0.0)
    h_ref[...] = z

    # BatchNorm1d (training-mode batch statistics, biased variance) on all but
    # the last layer; single-pass variance E[z^2] - mean^2.
    # TODO(synk): eval-mode running mean/var tracking is not implemented
    # (matches the training-mode forward of the reference module).
    @pl.when(bn_flags_ref[l] != 0)
    def _():
        zz = h_ref[...]
        mean = jnp.mean(zz, axis=0, keepdims=True)
        var = jnp.maximum(jnp.mean(zz * zz, axis=0, keepdims=True) - mean * mean, 0.0)
        h_ref[...] = (gamma_ref[0] * (zz - mean) * jax.lax.rsqrt(var + _BN_EPS)
                      + beta_ref[0])

    # Only the final activation ever leaves VMEM.
    @pl.when(l == n_layers - 1)
    def _():
        out_ref[...] = h_ref[...]


@jax.jit
def _decoder_pallas(params, x, adj):
    n, d = x.shape
    n_layers = params["w1"].shape[0]
    num_bn = params["gamma"].shape[0]

    def stay(l, flags):            # whole array, same block every layer -> one DMA
        return (0, 0)

    def per_layer(l, flags):       # layer-l slice of the stacked parameters
        return (l, 0, 0)

    def bn_layer(l, flags):        # last (no-BN) layer reuses the previous block
        return (jnp.minimum(l, num_bn - 1), 0, 0)   # -> no dead gamma/beta DMA

    flops = n_layers * (2 * n * n * d + 4 * n * d * d)
    bytes_accessed = int(
        sum(int(v.size) * 4 for v in (x, adj, params["w1"], params["b1"],
                                      params["w2"], params["b2"],
                                      params["gamma"], params["beta"],
                                      params["bn_flags"]))
        + n * d * 4)
    cost = pl.CostEstimate(flops=flops,
                           transcendentals=(n_layers - 1) * d,
                           bytes_accessed=bytes_accessed)

    # TODO(synk): at large graph sizes (N >~ 2k) the dense [N, N] adjacency should
    # switch to a row-blocked BlockSpec with a "parallel" node axis (v7x: 64 MiB
    # VMEM, 2 TCs); at N=24 the whole-array VMEM block is optimal.
    grid_spec = pltpu.PrefetchScalarGridSpec(
        num_scalar_prefetch=1,
        grid=(n_layers,),
        in_specs=[
            pl.BlockSpec((n, d), stay),           # x
            pl.BlockSpec((n, n), stay),           # adj
            pl.BlockSpec((1, d, d), per_layer),   # w1  [L, D, D]
            pl.BlockSpec((1, 1, d), per_layer),   # b1  [L, 1, D]
            pl.BlockSpec((1, d, d), per_layer),   # w2  [L, D, D]
            pl.BlockSpec((1, 1, d), per_layer),   # b2  [L, 1, D]
            pl.BlockSpec((1, 1, d), bn_layer),    # gamma [L-1, 1, D]
            pl.BlockSpec((1, 1, d), bn_layer),    # beta  [L-1, 1, D]
        ],
        out_specs=pl.BlockSpec((n, d), stay),
        scratch_shapes=[pltpu.VMEM((n, d), jnp.float32)],
    )

    return pl.pallas_call(
        _decoder_stack_kernel,
        out_shape=jax.ShapeDtypeStruct((n, d), jnp.float32),
        grid_spec=grid_spec,
        compiler_params=pltpu.CompilerParams(
            dimension_semantics=("arbitrary",)),   # serial layer dependence
        cost_estimate=cost,
    )(params["bn_flags"], x, adj,
      params["w1"], params["b1"], params["w2"], params["b2"],
      params["gamma"], params["beta"])


# --------------------------- parameter construction ------------------------ #

def _linear_init(key, fan_in, fan_out):
    """Mimic torch.nn.Linear default init; weight stored as [in, out]."""
    kw, kb = jax.random.split(key)
    bound = 1.0 / jnp.sqrt(jnp.float32(fan_in))
    w = jax.random.uniform(kw, (fan_in, fan_out), jnp.float32, -bound, bound)
    b = jax.random.uniform(kb, (fan_out,), jnp.float32, -bound, bound)
    return w, b


def init_decoder_params(key, dim_in=32, dim_out=32, num_gc_layers=5):
    # The fused kernel stacks per-layer weights; all layers must share shapes.
    assert dim_out == dim_in, "fused layer stacking requires dim_out == dim_in"
    d = dim_in
    keys = jax.random.split(key, 2 * num_gc_layers)
    w1s, b1s, w2s, b2s = [], [], [], []
    for i in range(num_gc_layers):
        w1, b1 = _linear_init(keys[2 * i], d, d)
        w2, b2 = _linear_init(keys[2 * i + 1], d, d)
        w1s.append(w1); b1s.append(b1[None, :])
        w2s.append(w2); b2s.append(b2[None, :])
    num_bn = max(num_gc_layers - 1, 1)
    return dict(
        w1=jnp.stack(w1s),                              # [L, D, D]
        b1=jnp.stack(b1s),                              # [L, 1, D]
        w2=jnp.stack(w2s),                              # [L, D, D]
        b2=jnp.stack(b2s),                              # [L, 1, D]
        gamma=jnp.ones((num_bn, 1, d), jnp.float32),    # BN weight (layers 0..L-2)
        beta=jnp.zeros((num_bn, 1, d), jnp.float32),    # BN bias
        bn_flags=jnp.array([1 if i < num_gc_layers - 1 else 0
                            for i in range(num_gc_layers)], jnp.int32),
    )


# ------------------------------- forward pass ------------------------------ #

def decoder_forward(params, x, edge_index, batch=None):
    """Decoder.forward(x, edge_index, batch): returns [N, dim_out]. `batch` is unused."""
    del batch  # unused by the reference Decoder.forward
    n = x.shape[0]
    src, dst = edge_index[0], edge_index[1]
    # Dense adjacency for "add" aggregation: adj[i, j] = #edges j -> i.
    adj = jnp.zeros((n, n), jnp.float32).at[dst, src].add(1.0)
    return _decoder_pallas(params, x, adj)


def _decoder_reference(params, x, edge_index):
    """Pure-JAX reference for correctness checking."""
    n = x.shape[0]
    src, dst = edge_index[0], edge_index[1]
    adj = jnp.zeros((n, n), jnp.float32).at[dst, src].add(1.0)
    hp = jax.lax.Precision.HIGHEST
    h = x
    n_layers = params["w1"].shape[0]
    for i in range(n_layers):
        agg = h + jnp.dot(adj, h, precision=hp)
        z = jnp.dot(agg, params["w1"][i], precision=hp) + params["b1"][i]
        z = jnp.maximum(z, 0.0)
        z = jnp.dot(z, params["w2"][i], precision=hp) + params["b2"][i]
        z = jnp.maximum(z, 0.0)
        if i < n_layers - 1:
            mean = jnp.mean(z, axis=0, keepdims=True)
            var = jnp.mean((z - mean) ** 2, axis=0, keepdims=True)
            z = (params["gamma"][i] * (z - mean) * jax.lax.rsqrt(var + _BN_EPS)
                 + params["beta"][i])
        h = z
    return h


# ----------------------------------- main ----------------------------------- #

if __name__ == "__main__":
    key = jax.random.PRNGKey(0)
    k_param, k_x, k_e0, k_e1 = jax.random.split(key, 4)

    DIM = 32
    NUM_LAYERS = 5
    NUM_GRAPHS = 2
    NODES_PER_GRAPH = 12
    N = NUM_GRAPHS * NODES_PER_GRAPH        # 24 nodes
    EDGES_PER_GRAPH = 40

    # Node features [N, DIM]
    x = jax.random.normal(k_x, (N, DIM), jnp.float32)

    # edge_index [2, E]: random intra-graph edges (row 0 = source, row 1 = target)
    e0 = jax.random.randint(k_e0, (2, EDGES_PER_GRAPH), 0, NODES_PER_GRAPH)
    e1 = jax.random.randint(k_e1, (2, EDGES_PER_GRAPH), 0, NODES_PER_GRAPH) + NODES_PER_GRAPH
    edge_index = jnp.concatenate([e0, e1], axis=1).astype(jnp.int32)  # [2, 80]

    # batch vector [N] (present for interface parity; unused by Decoder.forward)
    batch = jnp.repeat(jnp.arange(NUM_GRAPHS, dtype=jnp.int32), NODES_PER_GRAPH)

    params = init_decoder_params(k_param, dim_in=DIM, dim_out=DIM,
                                 num_gc_layers=NUM_LAYERS)

    out = decoder_forward(params, x, edge_index, batch)
    jax.block_until_ready(out)

    assert out.shape == (N, DIM)
    assert bool(jnp.all(jnp.isfinite(out)))

    ref = _decoder_reference(params, x, edge_index)
    assert bool(jnp.allclose(out, ref, rtol=2e-3, atol=2e-3)), \
        f"max abs err {float(jnp.max(jnp.abs(out - ref)))}"

    print("KERNEL_OK")
</pallas_src>

<mosaic_0001>
module attributes {stable_mosaic.version = 11 : i64} {
  func.func @_decoder_stack_kernel(%arg0: i32, %arg1: memref<5xi32, #tpu.memory_space<smem>>, %arg2: memref<24x32xf32, #tpu.memory_space<vmem>>, %arg3: memref<24x24xf32, #tpu.memory_space<vmem>>, %arg4: memref<1x32x32xf32, #tpu.memory_space<vmem>>, %arg5: memref<1x1x32xf32, #tpu.memory_space<vmem>>, %arg6: memref<1x32x32xf32, #tpu.memory_space<vmem>>, %arg7: memref<1x1x32xf32, #tpu.memory_space<vmem>>, %arg8: memref<1x1x32xf32, #tpu.memory_space<vmem>>, %arg9: memref<1x1x32xf32, #tpu.memory_space<vmem>>, %arg10: memref<24x32xf32, #tpu.memory_space<vmem>>, %arg11: memref<24x32xf32, #tpu.memory_space<vmem>>) attributes {dimension_semantics = [#tpu.dimension_semantics<arbitrary>], iteration_bounds = array<i64: 5>, scalar_prefetch = 1 : i64, scratch_operands = 1 : i64, tpu.core_type = #tpu.core_type<tc>, window_params = [{pipeline_mode = #tpu.pipeline_mode<synchronous>, transform_indices = @transform_0, window_bounds = array<i64: 24, 32>}, {pipeline_mode = #tpu.pipeline_mode<synchronous>, transform_indices = @transform_1, window_bounds = array<i64: 24, 24>}, {transform_indices = @transform_2, window_bounds = array<i64: 1, 32, 32>}, {transform_indices = @transform_3, window_bounds = array<i64: 1, 1, 32>}, {transform_indices = @transform_4, window_bounds = array<i64: 1, 32, 32>}, {transform_indices = @transform_5, window_bounds = array<i64: 1, 1, 32>}, {transform_indices = @transform_6, window_bounds = array<i64: 1, 1, 32>}, {transform_indices = @transform_7, window_bounds = array<i64: 1, 1, 32>}, {pipeline_mode = #tpu.pipeline_mode<synchronous>, transform_indices = @transform_8, window_bounds = array<i64: 24, 32>}]} {
    %c0_i32 = arith.constant 0 : i32
    %0 = arith.cmpi eq, %arg0, %c0_i32 : i32
    %1 = arith.extui %0 : i1 to i32
    %c0_i32_0 = arith.constant 0 : i32
    %2 = arith.cmpi ne, %1, %c0_i32_0 : i32
    scf.if %2 {
      %c0_25 = arith.constant 0 : index
      %c0_26 = arith.constant 0 : index
      %34 = vector.load %arg2[%c0_25, %c0_26] : memref<24x32xf32, #tpu.memory_space<vmem>>, vector<24x32xf32>
      %c0_27 = arith.constant 0 : index
      %c0_28 = arith.constant 0 : index
      %35 = vector.load %arg11[%c0_27, %c0_28] : memref<24x32xf32, #tpu.memory_space<vmem>>, vector<24x32xf32>
      tpu.vector_store %arg11[%c0_27, %c0_28], %34 {strides = array<i32>} : memref<24x32xf32, #tpu.memory_space<vmem>>, vector<24x32xf32>,
    } else {
    }
    %c0 = arith.constant 0 : index
    %c0_1 = arith.constant 0 : index
    %3 = vector.load %arg11[%c0, %c0_1] : memref<24x32xf32, #tpu.memory_space<vmem>>, vector<24x32xf32>
    %c0_2 = arith.constant 0 : index
    %c0_3 = arith.constant 0 : index
    %4 = vector.load %arg3[%c0_2, %c0_3] : memref<24x24xf32, #tpu.memory_space<vmem>>, vector<24x24xf32>
    %cst = arith.constant dense<0.000000e+00> : vector<24x32xf32>
    %5 = tpu.matmul %4, %3, %cst {dimension_numbers = #tpu.dot_dimension_numbers<[1], [0], [0], [1], [0, 0, 1, 1], [], []>} : vector<24x24xf32>, vector<24x32xf32>, vector<24x32xf32> -> vector<24x32xf32>
    %6 = arith.addf %3, %5 : vector<24x32xf32>
    %c0_4 = arith.constant 0 : index
    %c0_5 = arith.constant 0 : index
    %c0_6 = arith.constant 0 : index
    %7 = vector.load %arg4[%c0_4, %c0_5, %c0_6] : memref<1x32x32xf32, #tpu.memory_space<vmem>>, vector<1x32x32xf32>
    %8 = vector.shape_cast %7 : vector<1x32x32xf32> to vector<32x32xf32>
    %cst_7 = arith.constant dense<0.000000e+00> : vector<24x32xf32>
    %9 = tpu.matmul %6, %8, %cst_7 {dimension_numbers = #tpu.dot_dimension_numbers<[1], [0], [0], [1], [0, 0, 1, 1], [], []>} : vector<24x32xf32>, vector<32x32xf32>, vector<24x32xf32> -> vector<24x32xf32>
    %c0_8 = arith.constant 0 : index
    %c0_9 = arith.constant 0 : index
    %c0_10 = arith.constant 0 : index
    %10 = vector.load %arg5[%c0_8, %c0_9, %c0_10] : memref<1x1x32xf32, #tpu.memory_space<vmem>>, vector<1x1x32xf32>
    %11 = vector.shape_cast %10 : vector<1x1x32xf32> to vector<1x32xf32>
    %12 = vector.broadcast %11 : vector<1x32xf32> to vector<24x32xf32>
    %13 = arith.addf %9, %12 : vector<24x32xf32>
    %cst_11 = arith.constant 0.000000e+00 : f32
    %14 = vector.broadcast %cst_11 : f32 to vector<24x32xf32>
    %15 = arith.maximumf %13, %14 : vector<24x32xf32>
    %c0_12 = arith.constant 0 : index
    %c0_13 = arith.constant 0 : index
    %c0_14 = arith.constant 0 : index
    %16 = vector.load %arg6[%c0_12, %c0_13, %c0_14] : memref<1x32x32xf32, #tpu.memory_space<vmem>>, vector<1x32x32xf32>
    %17 = vector.shape_cast %16 : vector<1x32x32xf32> to vector<32x32xf32>
    %cst_15 = arith.constant dense<0.000000e+00> : vector<24x32xf32>
    %18 = tpu.matmul %15, %17, %cst_15 {dimension_numbers = #tpu.dot_dimension_numbers<[1], [0], [0], [1], [0, 0, 1, 1], [], []>} : vector<24x32xf32>, vector<32x32xf32>, vector<24x32xf32> -> vector<24x32xf32>
    %c0_16 = arith.constant 0 : index
    %c0_17 = arith.constant 0 : index
    %c0_18 = arith.constant 0 : index
    %19 = vector.load %arg7[%c0_16, %c0_17, %c0_18] : memref<1x1x32xf32, #tpu.memory_space<vmem>>, vector<1x1x32xf32>
    %20 = vector.shape_cast %19 : vector<1x1x32xf32> to vector<1x32xf32>
    %21 = vector.broadcast %20 : vector<1x32xf32> to vector<24x32xf32>
    %22 = arith.addf %18, %21 : vector<24x32xf32>
    %cst_19 = arith.constant 0.000000e+00 : f32
    %23 = vector.broadcast %cst_19 : f32 to vector<24x32xf32>
    %24 = arith.maximumf %22, %23 : vector<24x32xf32>
    %c0_20 = arith.constant 0 : index
    %c0_21 = arith.constant 0 : index
    %25 = vector.load %arg11[%c0_20, %c0_21] : memref<24x32xf32, #tpu.memory_space<vmem>>, vector<24x32xf32>
    tpu.vector_store %arg11[%c0_20, %c0_21], %24 {strides = array<i32>} : memref<24x32xf32, #tpu.memory_space<vmem>>, vector<24x32xf32>,
    %26 = arith.index_cast %arg0 : i32 to index
    %27 = memref.load %arg1[%26] : memref<5xi32, #tpu.memory_space<smem>>
    %c0_i32_22 = arith.constant 0 : i32
    %28 = arith.cmpi ne, %27, %c0_i32_22 : i32
    %29 = arith.extui %28 : i1 to i32
    %c0_i32_23 = arith.constant 0 : i32
    %30 = arith.cmpi ne, %29, %c0_i32_23 : i32
    scf.if %30 {
      %c0_25 = arith.constant 0 : index
      %c0_26 = arith.constant 0 : index
      %34 = vector.load %arg11[%c0_25, %c0_26] : memref<24x32xf32, #tpu.memory_space<vmem>>, vector<24x32xf32>
      %cst_27 = arith.constant dense<0.000000e+00> : vector<32xf32>
      %35 = vector.multi_reduction <add>, %34, %cst_27 [0] : vector<24x32xf32> to vector<32xf32>
      %36 = vector.shape_cast %35 : vector<32xf32> to vector<1x32xf32>
      %cst_28 = arith.constant 2.400000e+01 : f32
      %37 = vector.broadcast %cst_28 : f32 to vector<1x32xf32>
      %38 = arith.divf %36, %37 : vector<1x32xf32>
      %39 = arith.mulf %34, %34 : vector<24x32xf32>
      %cst_29 = arith.constant dense<0.000000e+00> : vector<32xf32>
      %40 = vector.multi_reduction <add>, %39, %cst_29 [0] : vector<24x32xf32> to vector<32xf32>
      %41 = vector.shape_cast %40 : vector<32xf32> to vector<1x32xf32>
      %cst_30 = arith.constant 2.400000e+01 : f32
      %42 = vector.broadcast %cst_30 : f32 to vector<1x32xf32>
      %43 = arith.divf %41, %42 : vector<1x32xf32>
      %44 = arith.mulf %38, %38 : vector<1x32xf32>
      %45 = arith.subf %43, %44 : vector<1x32xf32>
      %cst_31 = arith.constant 0.000000e+00 : f32
      %46 = vector.broadcast %cst_31 : f32 to vector<1x32xf32>
      %47 = arith.maximumf %45, %46 : vector<1x32xf32>
      %c0_32 = arith.constant 0 : index
      %c0_33 = arith.constant 0 : index
      %c0_34 = arith.constant 0 : index
      %48 = vector.load %arg8[%c0_32, %c0_33, %c0_34] : memref<1x1x32xf32, #tpu.memory_space<vmem>>, vector<1x1x32xf32>
      %49 = vector.shape_cast %48 : vector<1x1x32xf32> to vector<1x32xf32>
      %50 = vector.broadcast %38 : vector<1x32xf32> to vector<24x32xf32>
      %51 = arith.subf %34, %50 : vector<24x32xf32>
      %52 = vector.broadcast %49 : vector<1x32xf32> to vector<24x32xf32>
      %53 = arith.mulf %52, %51 : vector<24x32xf32>
      %cst_35 = arith.constant 9.99999974E-6 : f32
      %54 = vector.broadcast %cst_35 : f32 to vector<1x32xf32>
      %55 = arith.addf %47, %54 : vector<1x32xf32>
      %56 = math.rsqrt %55 : vector<1x32xf32>
      %57 = vector.broadcast %56 : vector<1x32xf32> to vector<24x32xf32>
      %58 = arith.mulf %53, %57 : vector<24x32xf32>
      %c0_36 = arith.constant 0 : index
      %c0_37 = arith.constant 0 : index
      %c0_38 = arith.constant 0 : index
      %59 = vector.load %arg9[%c0_36, %c0_37, %c0_38] : memref<1x1x32xf32, #tpu.memory_space<vmem>>, vector<1x1x32xf32>
      %60 = vector.shape_cast %59 : vector<1x1x32xf32> to vector<1x32xf32>
      %61 = vector.broadcast %60 : vector<1x32xf32> to vector<24x32xf32>
      %62 = arith.addf %58, %61 : vector<24x32xf32>
      %c0_39 = arith.constant 0 : index
      %c0_40 = arith.constant 0 : index
      %63 = vector.load %arg11[%c0_39, %c0_40] : memref<24x32xf32, #tpu.memory_space<vmem>>, vector<24x32xf32>
      tpu.vector_store %arg11[%c0_39, %c0_40], %62 {strides = array<i32>} : memref<24x32xf32, #tpu.memory_space<vmem>>, vector<24x32xf32>,
    } else {
    }
    %c4_i32 = arith.constant 4 : i32
    %31 = arith.cmpi eq, %arg0, %c4_i32 : i32
    %32 = arith.extui %31 : i1 to i32
    %c0_i32_24 = arith.constant 0 : i32
    %33 = arith.cmpi ne, %32, %c0_i32_24 : i32
    scf.if %33 {
      %c0_25 = arith.constant 0 : index
      %c0_26 = arith.constant 0 : index
      %34 = vector.load %arg11[%c0_25, %c0_26] : memref<24x32xf32, #tpu.memory_space<vmem>>, vector<24x32xf32>
      %c0_27 = arith.constant 0 : index
      %c0_28 = arith.constant 0 : index
      %35 = vector.load %arg10[%c0_27, %c0_28] : memref<24x32xf32, #tpu.memory_space<vmem>>, vector<24x32xf32>
      tpu.vector_store %arg10[%c0_27, %c0_28], %34 {strides = array<i32>} : memref<24x32xf32, #tpu.memory_space<vmem>>, vector<24x32xf32>,
    } else {
    }
    return
  }
  func.func @transform_0(%arg0: i32, %arg1: memref<5xi32, #tpu.memory_space<smem>>) -> (i32, i32) {
    %c0_i32 = arith.constant 0 : i32
    %c0_i32_0 = arith.constant 0 : i32
    %c0_i32_1 = arith.constant 0 : i32
    return %c0_i32, %c0_i32_0 : i32, i32
  }
  func.func @transform_1(%arg0: i32, %arg1: memref<5xi32, #tpu.memory_space<smem>>) -> (i32, i32) {
    %c0_i32 = arith.constant 0 : i32
    %c0_i32_0 = arith.constant 0 : i32
    %c0_i32_1 = arith.constant 0 : i32
    return %c0_i32, %c0_i32_0 : i32, i32
  }
  func.func @transform_2(%arg0: i32, %arg1: memref<5xi32, #tpu.memory_space<smem>>) -> (i32, i32, i32) {
    %c0_i32 = arith.constant 0 : i32
    %c0_i32_0 = arith.constant 0 : i32
    %c0_i32_1 = arith.constant 0 : i32
    return %arg0, %c0_i32, %c0_i32_0 : i32, i32, i32
  }
  func.func @transform_3(%arg0: i32, %arg1: memref<5xi32, #tpu.memory_space<smem>>) -> (i32, i32, i32) {
    %c0_i32 = arith.constant 0 : i32
    %c0_i32_0 = arith.constant 0 : i32
    %c0_i32_1 = arith.constant 0 : i32
    return %arg0, %c0_i32, %c0_i32_0 : i32, i32, i32
  }
  func.func @transform_4(%arg0: i32, %arg1: memref<5xi32, #tpu.memory_space<smem>>) -> (i32, i32, i32) {
    %c0_i32 = arith.constant 0 : i32
    %c0_i32_0 = arith.constant 0 : i32
    %c0_i32_1 = arith.constant 0 : i32
    return %arg0, %c0_i32, %c0_i32_0 : i32, i32, i32
  }
  func.func @transform_5(%arg0: i32, %arg1: memref<5xi32, #tpu.memory_space<smem>>) -> (i32, i32, i32) {
    %c0_i32 = arith.constant 0 : i32
    %c0_i32_0 = arith.constant 0 : i32
    %c0_i32_1 = arith.constant 0 : i32
    return %arg0, %c0_i32, %c0_i32_0 : i32, i32, i32
  }
  func.func @transform_6(%arg0: i32, %arg1: memref<5xi32, #tpu.memory_space<smem>>) -> (i32, i32, i32) {
    %c3_i32 = arith.constant 3 : i32
    %0 = arith.minsi %arg0, %c3_i32 : i32
    %c0_i32 = arith.constant 0 : i32
    %c0_i32_0 = arith.constant 0 : i32
    %c0_i32_1 = arith.constant 0 : i32
    return %0, %c0_i32, %c0_i32_0 : i32, i32, i32
  }
  func.func @transform_7(%arg0: i32, %arg1: memref<5xi32, #tpu.memory_space<smem>>) -> (i32, i32, i32) {
    %c3_i32 = arith.constant 3 : i32
    %0 = arith.minsi %arg0, %c3_i32 : i32
    %c0_i32 = arith.constant 0 : i32
    %c0_i32_0 = arith.constant 0 : i32
    %c0_i32_1 = arith.constant 0 : i32
    return %0, %c0_i32, %c0_i32_0 : i32, i32, i32
  }
  func.func @transform_8(%arg0: i32, %arg1: memref<5xi32, #tpu.memory_space<smem>>) -> (i32, i32) {
    %c0_i32 = arith.constant 0 : i32
    %c0_i32_0 = arith.constant 0 : i32
    %c0_i32_1 = arith.constant 0 : i32
    return %c0_i32, %c0_i32_0 : i32, i32
  }
}

</mosaic_0001>

<llo_original>
// kernel: _decoder_pallas.1
$region0: #{_decoder_pallas.1}
  #allocation0 [shape = 'u32[]', space=smem, size = 0x4, offset = 0x4, fixed_abs, tag = 'smem constant byte address 0x4 - core index']
  #allocation1 [shape = 'u32[72,128]{1,0:T(1,128)}', space=vmem, size = 0x9000, scoped, tag = 'internal scratch']
  #allocation2 [shape = 'f32[24,32]{1,0:T(8,128)}', space=vmem, size = 0x3000, scoped, tag = 'scratch operand']
  #allocation3 [shape = 's32[1]{0}', space=sflag, size = 0x4, scoped, tag = 'scoped memory for _decoder_pallas.1']
  #allocation4 [shape = 'u8[512]{0}', space=smem, size = 0x200, scoped, tag = 'prefetched SMEM operand 0']
  %s0 = inlined_call_operand.vmem [shape: s32[5], index: 0, kind: input, shape index: {}]
  %s1 = inlined_call_operand.hbm [shape: f32[24,32], index: 1, kind: input, shape index: {}]
  %s2 = inlined_call_operand.hbm [shape: f32[24,24], index: 2, kind: input, shape index: {}]
  %s3 = inlined_call_operand.hbm [shape: f32[5,32,32], index: 3, kind: input, shape index: {}]
  %s4 = inlined_call_operand.hbm [shape: f32[5,1,32], index: 4, kind: input, shape index: {}]
  %s5 = inlined_call_operand.hbm [shape: f32[5,32,32], index: 5, kind: input, shape index: {}]
  %s6 = inlined_call_operand.hbm [shape: f32[5,1,32], index: 6, kind: input, shape index: {}]
  %s7 = inlined_call_operand.hbm [shape: f32[4,1,32], index: 7, kind: input, shape index: {}]
  %s8 = inlined_call_operand.hbm [shape: f32[4,1,32], index: 8, kind: input, shape index: {}]
  %s9 = inlined_call_operand.hbm [shape: f32[24,32], index: 9, kind: output, shape index: {}]
  %s10 = sld [smem:[#allocation0]]
  $region109: #{_decoder_pallas.1} parent=0
    _
  %s12 = ssub.s32 1, %s10
  %s13 = scalar_select 0, %s12, %s10
  %s15 = sshll.u32 %s0, 4
  %s16 = int_to_ptr.vmem [resolvable:$true] %s15
  %18 = dma.vmem_to_smem %s16, 16, [#allocation4], [#allocation3]
  %20 = dma.done [#allocation3], 16
  %21 = sfence
  $region1: #{_decoder_pallas.1} parent=0
    #allocation5 [shape = 'u8[12288]{0}', space=vmem, size = 0x3000, scoped, tag = 'input window, operand 1, single buffered']
    #allocation6 [shape = 's32[2]{0}', space=sflag, size = 0x8, scoped, tag = 'scoped memory for _decoder_pallas.1']
    #allocation7 [shape = 's32[2]{0}', space=sflag, size = 0x8, scoped, tag = 'scoped memory for _decoder_pallas.1']
    #allocation8 [shape = 'u8[12288]{0}', space=vmem, size = 0x3000, scoped, tag = 'input window, operand 2, single buffered']
    #allocation9 [shape = 's32[1]{0}', space=sflag, size = 0x4, scoped, tag = 'scoped memory for _decoder_pallas.1']
    #allocation10 [shape = 'u8[32768]{0}', space=vmem, size = 0x8000, scoped, tag = 'input window, operand 3']
    #allocation11 [shape = 'u8[1024]{0}', space=vmem, size = 0x400, scoped, tag = 'input window, operand 4']
    #allocation12 [shape = 'u8[32768]{0}', space=vmem, size = 0x8000, scoped, tag = 'input window, operand 5']
    #allocation13 [shape = 'u8[1024]{0}', space=vmem, size = 0x400, scoped, tag = 'input window, operand 6']
    #allocation14 [shape = 'u8[1024]{0}', space=vmem, size = 0x400, scoped, tag = 'input window, operand 7']
    #allocation15 [shape = 'u8[1024]{0}', space=vmem, size = 0x400, scoped, tag = 'input window, operand 8']
    #allocation16 [shape = 'u8[12288]{0}', space=vmem, size = 0x3000, scoped, tag = 'output window, operand 0, single buffered']
    %22 = vsyncpa [#allocation6], 0
    %23 = vsyncpa [#allocation9], 0
    %24 = vsyncpa [#allocation7], 0
    loop: start=0, step=1, limit=7
    $region2: #{_decoder_pallas.1} parent=1 // loop_pre_header
      _
    $region3: #{_decoder_pallas.1} parent=1 // loop_header
      %s26 = sphi 0, %s30
      %p27 = scmp.ge.s32.totalorder %s26, 7
      %s34 = sphi 0, %s34
      %s36 = sphi 0, %s34
      %s37 = sphi 0, %s36
      %s51 = sphi 0, %s37
      %s55 = sphi 0, %s55
      %s57 = sphi 0, %s55
      %s58 = sphi 0, %s57
      %s72 = sphi 0, %s58
      %s78 = sphi 0, %s80
      %s81 = sphi 0, %s78
      %s82 = sphi 0, %s81
      %s98 = sphi 0, %s82
      %s104 = sphi 0, %s106
      %s107 = sphi 0, %s104
      %s108 = sphi 0, %s107
      %s124 = sphi 0, %s108
      %s130 = sphi 0, %s132
      %s133 = sphi 0, %s130
      %s134 = sphi 0, %s133
      %s150 = sphi 0, %s134
      %s156 = sphi 0, %s158
      %s159 = sphi 0, %s156
      %s160 = sphi 0, %s159
      %s176 = sphi 0, %s160
      %s186 = sphi 0, %s188
      %s189 = sphi 0, %s186
      %s190 = sphi 0, %s189
      %s206 = sphi 0, %s190
      %s216 = sphi 0, %s218
      %s219 = sphi 0, %s216
      %s220 = sphi 0, %s219
      %s236 = sphi 0, %s220
      %s240 = sphi 0, %s240
      %s242 = sphi 0, %s240
      %s243 = sphi 0, %s242
      %s257 = sphi 0, %s243
    $region4: #{_decoder_pallas.1} parent=1 // loop_header_branch
      %29 = sbr.rel (%p27) target = $region8
    $region5: #{_decoder_pallas.1} parent=1 // loop_body
      %s31 = ssub.s32 %s26, 1
      %s32 = ssub.s32 %s26, 2
      %s33 = sadd.s32 %s26, 1
      %s35 = sadd.s32 %s34, 1
      %p38 = scmp.eq.s32.totalorder %s26, 4
      %p39 = scmp.ne.s32.totalorder %s34, %s36
      %p40 = scmp.eq.s32.totalorder %s26, 0
      %p41 = por %p39, %p40
      %p42 = scmp.ne.s32.totalorder %s34, %s36
      %p43 = scmp.eq.s32.totalorder %s31, 4
      %p44 = por %p42, %p43
      %p45 = scmp.ne.s32.totalorder %s36, %s37
      %p46 = scmp.eq.s32.totalorder %s31, 0
      %p47 = por %p45, %p46
      %p48 = scmp.ne.s32.totalorder %s36, %s37
      %p49 = scmp.eq.s32.totalorder %s32, 4
      %p50 = por %p48, %p49
      %p52 = scmp.ne.s32.totalorder %s37, %s51
      %p53 = scmp.eq.s32.totalorder %s32, 0
      %p54 = por %p52, %p53
      %s56 = sadd.s32 %s55, 1
      %p59 = scmp.eq.s32.totalorder %s26, 4
      %p60 = scmp.ne.s32.totalorder %s55, %s57
      %p61 = scmp.eq.s32.totalorder %s26, 0
      %p62 = por %p60, %p61
      %p63 = scmp.ne.s32.totalorder %s55, %s57
      %p64 = scmp.eq.s32.totalorder %s31, 4
      %p65 = por %p63, %p64
      %p66 = scmp.ne.s32.totalorder %s57, %s58
      %p67 = scmp.eq.s32.totalorder %s31, 0
      %p68 = por %p66, %p67
      %p69 = scmp.ne.s32.totalorder %s57, %s58
      %p70 = scmp.eq.s32.totalorder %s32, 4
      %p71 = por %p69, %p70
      %p73 = scmp.ne.s32.totalorder %s58, %s72
      %p74 = scmp.eq.s32.totalorder %s32, 0
      %p75 = por %p73, %p74
      %s76 = ssub.s32 %s26, %s33
      %p77 = scmp.eq.s32.totalorder %s76, 0
      %s79 = sadd.s32 %s78, 1
      %s80 = scalar_select %p77, %s78, %s79
      %p83 = pneg %p77
      %p84 = scmp.eq.s32.totalorder %s26, 4
      %p85 = por %p83, %p84
      %p86 = scmp.ne.s32.totalorder %s78, %s81
      %p87 = scmp.eq.s32.totalorder %s26, 0
      %p88 = por %p86, %p87
      %p89 = scmp.ne.s32.totalorder %s78, %s81
      %p90 = scmp.eq.s32.totalorder %s31, 4
      %p91 = por %p89, %p90
      %p92 = scmp.ne.s32.totalorder %s81, %s82
      %p93 = scmp.eq.s32.totalorder %s31, 0
      %p94 = por %p92, %p93
      %p95 = scmp.ne.s32.totalorder %s81, %s82
      %p96 = scmp.eq.s32.totalorder %s32, 4
      %p97 = por %p95, %p96
      %p99 = scmp.ne.s32.totalorder %s82, %s98
      %p100 = scmp.eq.s32.totalorder %s32, 0
      %p101 = por %p99, %p100
      %s102 = ssub.s32 %s26, %s33
      %p103 = scmp.eq.s32.totalorder %s102, 0
      %s105 = sadd.s32 %s104, 1
      %s106 = scalar_select %p103, %s104, %s105
      %p109 = pneg %p103
      %p110 = scmp.eq.s32.totalorder %s26, 4
      %p111 = por %p109, %p110
      %p112 = scmp.ne.s32.totalorder %s104, %s107
      %p113 = scmp.eq.s32.totalorder %s26, 0
      %p114 = por %p112, %p113
      %p115 = scmp.ne.s32.totalorder %s104, %s107
      %p116 = scmp.eq.s32.totalorder %s31, 4
      %p117 = por %p115, %p116
      %p118 = scmp.ne.s32.totalorder %s107, %s108
      %p119 = scmp.eq.s32.totalorder %s31, 0
      %p120 = por %p118, %p119
      %p121 = scmp.ne.s32.totalorder %s107, %s108
      %p122 = scmp.eq.s32.totalorder %s32, 4
      %p123 = por %p121, %p122
      %p125 = scmp.ne.s32.totalorder %s108, %s124
      %p126 = scmp.eq.s32.totalorder %s32, 0
      %p127 = por %p125, %p126
      %s128 = ssub.s32 %s26, %s33
      %p129 = scmp.eq.s32.totalorder %s128, 0
      %s131 = sadd.s32 %s130, 1
      %s132 = scalar_select %p129, %s130, %s131
      %p135 = pneg %p129
      %p136 = scmp.eq.s32.totalorder %s26, 4
      %p137 = por %p135, %p136
      %p138 = scmp.ne.s32.totalorder %s130, %s133
      %p139 = scmp.eq.s32.totalorder %s26, 0
      %p140 = por %p138, %p139
      %p141 = scmp.ne.s32.totalorder %s130, %s133
      %p142 = scmp.eq.s32.totalorder %s31, 4
      %p143 = por %p141, %p142
      %p144 = scmp.ne.s32.totalorder %s133, %s134
      %p145 = scmp.eq.s32.totalorder %s31, 0
      %p146 = por %p144, %p145
      %p147 = scmp.ne.s32.totalorder %s133, %s134
      %p148 = scmp.eq.s32.totalorder %s32, 4
      %p149 = por %p147, %p148
      %p151 = scmp.ne.s32.totalorder %s134, %s150
      %p152 = scmp.eq.s32.totalorder %s32, 0
      %p153 = por %p151, %p152
      %s154 = ssub.s32 %s26, %s33
      %p155 = scmp.eq.s32.totalorder %s154, 0
      %s157 = sadd.s32 %s156, 1
      %s158 = scalar_select %p155, %s156, %s157
      %p161 = pneg %p155
      %p162 = scmp.eq.s32.totalorder %s26, 4
      %p163 = por %p161, %p162
      %p164 = scmp.ne.s32.totalorder %s156, %s159
      %p165 = scmp.eq.s32.totalorder %s26, 0
      %p166 = por %p164, %p165
      %p167 = scmp.ne.s32.totalorder %s156, %s159
      %p168 = scmp.eq.s32.totalorder %s31, 4
      %p169 = por %p167, %p168
      %p170 = scmp.ne.s32.totalorder %s159, %s160
      %p171 = scmp.eq.s32.totalorder %s31, 0
      %p172 = por %p170, %p171
      %p173 = scmp.ne.s32.totalorder %s159, %s160
      %p174 = scmp.eq.s32.totalorder %s32, 4
      %p175 = por %p173, %p174
      %p177 = scmp.ne.s32.totalorder %s160, %s176
      %p178 = scmp.eq.s32.totalorder %s32, 0
      %p179 = por %p177, %p178
      %p180 = scmp.lt.s32.totalorder %s26, 3
      %s181 = scalar_select %p180, %s26, 3
      %p182 = scmp.lt.s32.totalorder %s33, 3
      %s183 = scalar_select %p182, %s33, 3
      %s184 = ssub.s32 %s181, %s183
      %p185 = scmp.eq.s32.totalorder %s184, 0
      %s187 = sadd.s32 %s186, 1
      %s188 = scalar_select %p185, %s186, %s187
      %p191 = pneg %p185
      %p192 = scmp.eq.s32.totalorder %s26, 4
      %p193 = por %p191, %p192
      %p194 = scmp.ne.s32.totalorder %s186, %s189
      %p195 = scmp.eq.s32.totalorder %s26, 0
      %p196 = por %p194, %p195
      %p197 = scmp.ne.s32.totalorder %s186, %s189
      %p198 = scmp.eq.s32.totalorder %s31, 4
      %p199 = por %p197, %p198
      %p200 = scmp.ne.s32.totalorder %s189, %s190
      %p201 = scmp.eq.s32.totalorder %s31, 0
      %p202 = por %p200, %p201
      %p203 = scmp.ne.s32.totalorder %s189, %s190
      %p204 = scmp.eq.s32.totalorder %s32, 4
      %p205 = por %p203, %p204
      %p207 = scmp.ne.s32.totalorder %s190, %s206
      %p208 = scmp.eq.s32.totalorder %s32, 0
      %p209 = por %p207, %p208
      %p210 = scmp.lt.s32.totalorder %s26, 3
      %s211 = scalar_select %p210, %s26, 3
      %p212 = scmp.lt.s32.totalorder %s33, 3
      %s213 = scalar_select %p212, %s33, 3
      %s214 = ssub.s32 %s211, %s213
      %p215 = scmp.eq.s32.totalorder %s214, 0
      %s217 = sadd.s32 %s216, 1
      %s218 = scalar_select %p215, %s216, %s217
      %p221 = pneg %p215
      %p222 = scmp.eq.s32.totalorder %s26, 4
      %p223 = por %p221, %p222
      %p224 = scmp.ne.s32.totalorder %s216, %s219
      %p225 = scmp.eq.s32.totalorder %s26, 0
      %p226 = por %p224, %p225
      %p227 = scmp.ne.s32.totalorder %s216, %s219
      %p228 = scmp.eq.s32.totalorder %s31, 4
      %p229 = por %p227, %p228
      %p230 = scmp.ne.s32.totalorder %s219, %s220
      %p231 = scmp.eq.s32.totalorder %s31, 0
      %p232 = por %p230, %p231
      %p233 = scmp.ne.s32.totalorder %s219, %s220
      %p234 = scmp.eq.s32.totalorder %s32, 4
      %p235 = por %p233, %p234
      %p237 = scmp.ne.s32.totalorder %s220, %s236
      %p238 = scmp.eq.s32.totalorder %s32, 0
      %p239 = por %p237, %p238
      %s241 = sadd.s32 %s240, 1
      %p244 = scmp.eq.s32.totalorder %s26, 4
      %p245 = scmp.ne.s32.totalorder %s240, %s242
      %p246 = scmp.eq.s32.totalorder %s26, 0
      %p247 = por %p245, %p246
      %p248 = scmp.ne.s32.totalorder %s240, %s242
      %p249 = scmp.eq.s32.totalorder %s31, 4
      %p250 = por %p248, %p249
      %p251 = scmp.ne.s32.totalorder %s242, %s243
      %p252 = scmp.eq.s32.totalorder %s31, 0
      %p253 = por %p251, %p252
      %p254 = scmp.ne.s32.totalorder %s242, %s243
      %p255 = scmp.eq.s32.totalorder %s32, 4
      %p256 = por %p254, %p255
      %p258 = scmp.ne.s32.totalorder %s243, %s257
      %p259 = scmp.eq.s32.totalorder %s32, 0
      %p260 = por %p258, %p259
      %p261 = scmp.le.s32.totalorder 1, %s26
      %p262 = scmp.lt.s32.totalorder %s26, 6
      %p263 = pnand %p261, %p262
      %p264 = pneg %p263
      // Predicated region
      $region9: #{_decoder_pallas.1} parent=5 // pred_check
        _
      $region10: #{_decoder_pallas.1} parent=5 // pred_check_branch
        %266 = sbr.rel (%p263) target = $region12
      $region11: #{_decoder_pallas.1} parent=5 // pred_region
        %s267 = ssub.s32 %s26, 1
        // Predicated region
        $region13: #{_decoder_pallas.1} parent=11 // pred_check
          %p268 = pneg %p47
        $region14: #{_decoder_pallas.1} parent=11 // pred_check_branch
          %270 = sbr.rel (%p268) target = $region16
        $region15: #{_decoder_pallas.1} parent=11 // pred_region
          %272 = vsyncadd [#allocation6], 0
          %s273 = sshll.u32 %s1, 4
          %s274 = int_to_ptr.hbm [resolvable:$true] %s273
          %s275 = sshll.u32 [#allocation5], 4
          %s276 = int_to_ptr.vmem [resolvable:$true] %s275
          %281 = dma.hbm_to_vmem [thread:$0]  %s274, 384, %s276, [#allocation6], 128, 128, 8
        $region16: #{_decoder_pallas.1} parent=11 // pred_fallthru
          _
        // Predicated region
        $region17: #{_decoder_pallas.1} parent=11 // pred_check
          %p282 = pneg %p68
        $region18: #{_decoder_pallas.1} parent=11 // pred_check_branch
          %284 = sbr.rel (%p282) target = $region20
        $region19: #{_decoder_pallas.1} parent=11 // pred_region
          %286 = vsyncadd [#allocation9], 0
          %s287 = sshll.u32 %s2, 4
          %s288 = int_to_ptr.hbm [resolvable:$true] %s287
          %s289 = sshll.u32 [#allocation8], 4
          %s290 = int_to_ptr.vmem [resolvable:$true] %s289
          %295 = dma.hbm_to_vmem [thread:$0]  %s288, 384, %s290, [#allocation9], 128, 128, 8
        $region20: #{_decoder_pallas.1} parent=11 // pred_fallthru
          _
      $region12: #{_decoder_pallas.1} parent=5 // pred_fallthru
        _
      %p296 = scmp.lt.s32.totalorder %s26, 5
      // Predicated region
      $region21: #{_decoder_pallas.1} parent=5 // pred_check
        %p297 = pneg %p296
      $region22: #{_decoder_pallas.1} parent=5 // pred_check_branch
        %299 = sbr.rel (%p297) target = $region24
      $region23: #{_decoder_pallas.1} parent=5 // pred_region
        // Predicated region
        $region25: #{_decoder_pallas.1} parent=23 // pred_check
          %p300 = pneg %p88
        $region26: #{_decoder_pallas.1} parent=23 // pred_check_branch
          %302 = sbr.rel (%p300) target = $region28
        $region27: #{_decoder_pallas.1} parent=23 // pred_region
          %s303 = sand.u32 %s26, 1
          %s304 = scalar_lea.sflag [#allocation6], %s303
          %s305 = sand.u32 %s78, 1
          %s306 = smul.addr %s305, 32
          %s307 = scalar_lea.vmem [#allocation10], %s306
          %309 = vsyncadd %s304, 0
          %s310 = smul.addr %s26, 4
          %s311 = smul.addr %s310, 8
          %s312 = scalar_lea.hbm %s3, %s311
          %s313 = sshll.u32 %s312, 4
          %s314 = int_to_ptr.hbm [resolvable:$true] %s313
          %s315 = sshll.u32 %s307, 4
          %s316 = int_to_ptr.vmem [resolvable:$true] %s315
          %321 = dma.hbm_to_vmem [thread:$0]  %s314, 512, %s316, %s304, 128, 128, 8
        $region28: #{_decoder_pallas.1} parent=23 // pred_fallthru
          _
        // Predicated region
        $region29: #{_decoder_pallas.1} parent=23 // pred_check
          %p322 = pneg %p114
        $region30: #{_decoder_pallas.1} parent=23 // pred_check_branch
          %324 = sbr.rel (%p322) target = $region32
        $region31: #{_decoder_pallas.1} parent=23 // pred_region
          %s325 = sand.u32 %s26, 1
          %s326 = scalar_lea.sflag [#allocation6], %s325
          %s327 = sand.u32 %s104, 1
          %s328 = scalar_lea.vmem [#allocation11], %s327
          %330 = vsyncadd %s326, 0
          %s331 = scalar_lea.hbm %s4, %s26
          %s333 = sshll.u32 %s331, 4
          %s334 = int_to_ptr.hbm [resolvable:$true] %s333
          %s335 = sshll.u32 %s328, 4
          %s336 = int_to_ptr.vmem [resolvable:$true] %s335
          %338 = dma.hbm_to_vmem [thread:$0]  %s334, 16, %s336, %s326
        $region32: #{_decoder_pallas.1} parent=23 // pred_fallthru
          _
        // Predicated region
        $region33: #{_decoder_pallas.1} parent=23 // pred_check
          %p339 = pneg %p140
        $region34: #{_decoder_pallas.1} parent=23 // pred_check_branch
          %341 = sbr.rel (%p339) target = $region36
        $region35: #{_decoder_pallas.1} parent=23 // pred_region
          %s342 = sand.u32 %s26, 1
          %s343 = scalar_lea.sflag [#allocation6], %s342
          %s344 = sand.u32 %s130, 1
          %s345 = smul.addr %s344, 32
          %s346 = scalar_lea.vmem [#allocation12], %s345
          %348 = vsyncadd %s343, 0
          %s349 = smul.addr %s26, 4
          %s350 = smul.addr %s349, 8
          %s351 = scalar_lea.hbm %s5, %s350
          %s352 = sshll.u32 %s351, 4
          %s353 = int_to_ptr.hbm [resolvable:$true] %s352
          %s354 = sshll.u32 %s346, 4
          %s355 = int_to_ptr.vmem [resolvable:$true] %s354
          %360 = dma.hbm_to_vmem [thread:$0]  %s353, 512, %s355, %s343, 128, 128, 8
        $region36: #{_decoder_pallas.1} parent=23 // pred_fallthru
          _
        // Predicated region
        $region37: #{_decoder_pallas.1} parent=23 // pred_check
          %p361 = pneg %p166
        $region38: #{_decoder_pallas.1} parent=23 // pred_check_branch
          %363 = sbr.rel (%p361) target = $region40
        $region39: #{_decoder_pallas.1} parent=23 // pred_region
          %s364 = sand.u32 %s26, 1
          %s365 = scalar_lea.sflag [#allocation6], %s364
          %s366 = sand.u32 %s156, 1
          %s367 = scalar_lea.vmem [#allocation13], %s366
          %369 = vsyncadd %s365, 0
          %s370 = scalar_lea.hbm %s6, %s26
          %s372 = sshll.u32 %s370, 4
          %s373 = int_to_ptr.hbm [resolvable:$true] %s372
          %s374 = sshll.u32 %s367, 4
          %s375 = int_to_ptr.vmem [resolvable:$true] %s374
          %377 = dma.hbm_to_vmem [thread:$0]  %s373, 16, %s375, %s365
        $region40: #{_decoder_pallas.1} parent=23 // pred_fallthru
          _
        // Predicated region
        $region41: #{_decoder_pallas.1} parent=23 // pred_check
          %p378 = pneg %p196
        $region42: #{_decoder_pallas.1} parent=23 // pred_check_branch
          %380 = sbr.rel (%p378) target = $region44
        $region43: #{_decoder_pallas.1} parent=23 // pred_region
          %s381 = sand.u32 %s26, 1
          %s382 = scalar_lea.sflag [#allocation6], %s381
          %s383 = sand.u32 %s186, 1
          %s384 = scalar_lea.vmem [#allocation14], %s383
          %p385 = scmp.lt.s32.totalorder %s26, 3
          %s386 = scalar_select %p385, %s26, 3
          %388 = vsyncadd %s382, 0
          %s389 = scalar_lea.hbm %s7, %s386
          %s391 = sshll.u32 %s389, 4
          %s392 = int_to_ptr.hbm [resolvable:$true] %s391
          %s393 = sshll.u32 %s384, 4
          %s394 = int_to_ptr.vmem [resolvable:$true] %s393
          %396 = dma.hbm_to_vmem [thread:$0]  %s392, 16, %s394, %s382
        $region44: #{_decoder_pallas.1} parent=23 // pred_fallthru
          _
        // Predicated region
        $region45: #{_decoder_pallas.1} parent=23 // pred_check
          %p397 = pneg %p226
        $region46: #{_decoder_pallas.1} parent=23 // pred_check_branch
          %399 = sbr.rel (%p397) target = $region48
        $region47: #{_decoder_pallas.1} parent=23 // pred_region
          %s400 = sand.u32 %s26, 1
          %s401 = scalar_lea.sflag [#allocation6], %s400
          %s402 = sand.u32 %s216, 1
          %s403 = scalar_lea.vmem [#allocation15], %s402
          %p404 = scmp.lt.s32.totalorder %s26, 3
          %s405 = scalar_select %p404, %s26, 3
          %407 = vsyncadd %s401, 0
          %s408 = scalar_lea.hbm %s8, %s405
          %s410 = sshll.u32 %s408, 4
          %s411 = int_to_ptr.hbm [resolvable:$true] %s410
          %s412 = sshll.u32 %s403, 4
          %s413 = int_to_ptr.vmem [resolvable:$true] %s412
          %415 = dma.hbm_to_vmem [thread:$0]  %s411, 16, %s413, %s401
        $region48: #{_decoder_pallas.1} parent=23 // pred_fallthru
          _
      $region24: #{_decoder_pallas.1} parent=5 // pred_fallthru
        _
      %p416 = scmp.le.s32.totalorder 1, %s26
      %p417 = scmp.lt.s32.totalorder %s26, 6
      %p418 = pnand %p416, %p417
      %p419 = pneg %p418
      // Predicated region
      $region49: #{_decoder_pallas.1} parent=5 // pred_check
        _
      $region50: #{_decoder_pallas.1} parent=5 // pred_check_branch
        %421 = sbr.rel (%p418) target = $region52
      $region51: #{_decoder_pallas.1} parent=5 // pred_region
        %s422 = ssub.s32 %s26, 1
        // Predicated region
        $region53: #{_decoder_pallas.1} parent=51 // pred_check
          %p423 = pneg %p47
        $region54: #{_decoder_pallas.1} parent=51 // pred_check_branch
          %425 = sbr.rel (%p423) target = $region56
        $region55: #{_decoder_pallas.1} parent=51 // pred_region
          %427 = dma.done [#allocation6], 384
        $region56: #{_decoder_pallas.1} parent=51 // pred_fallthru
          _
        // Predicated region
        $region57: #{_decoder_pallas.1} parent=51 // pred_check
          %p428 = pneg %p68
        $region58: #{_decoder_pallas.1} parent=51 // pred_check_branch
          %430 = sbr.rel (%p428) target = $region60
        $region59: #{_decoder_pallas.1} parent=51 // pred_region
          %432 = dma.done [#allocation9], 384
        $region60: #{_decoder_pallas.1} parent=51 // pred_fallthru
          _
        %s433 = sand.u32 %s31, 1
        %s434 = scalar_lea.sflag [#allocation6], %s433
        %s435 = sand.u32 %s81, 1
        %s436 = smul.addr %s435, 32
        %s437 = scalar_lea.vmem [#allocation10], %s436
        // Predicated region
        $region61: #{_decoder_pallas.1} parent=51 // pred_check
          %p438 = pneg %p94
        $region62: #{_decoder_pallas.1} parent=51 // pred_check_branch
          %440 = sbr.rel (%p438) target = $region64
        $region63: #{_decoder_pallas.1} parent=51 // pred_region
          %442 = dma.done %s434, 512
        $region64: #{_decoder_pallas.1} parent=51 // pred_fallthru
          _
        %s443 = sand.u32 %s31, 1
        %s444 = scalar_lea.sflag [#allocation6], %s443
        %s445 = sand.u32 %s107, 1
        %s446 = scalar_lea.vmem [#allocation11], %s445
        // Predicated region
        $region65: #{_decoder_pallas.1} parent=51 // pred_check
          %p447 = pneg %p120
        $region66: #{_decoder_pallas.1} parent=51 // pred_check_branch
          %449 = sbr.rel (%p447) target = $region68
        $region67: #{_decoder_pallas.1} parent=51 // pred_region
          %451 = dma.done %s444, 16
        $region68: #{_decoder_pallas.1} parent=51 // pred_fallthru
          _
        %s452 = sand.u32 %s31, 1
        %s453 = scalar_lea.sflag [#allocation6], %s452
        %s454 = sand.u32 %s133, 1
        %s455 = smul.addr %s454, 32
        %s456 = scalar_lea.vmem [#allocation12], %s455
        // Predicated region
        $region69: #{_decoder_pallas.1} parent=51 // pred_check
          %p457 = pneg %p146
        $region70: #{_decoder_pallas.1} parent=51 // pred_check_branch
          %459 = sbr.rel (%p457) target = $region72
        $region71: #{_decoder_pallas.1} parent=51 // pred_region
          %461 = dma.done %s453, 512
        $region72: #{_decoder_pallas.1} parent=51 // pred_fallthru
          _
        %s462 = sand.u32 %s31, 1
        %s463 = scalar_lea.sflag [#allocation6], %s462
        %s464 = sand.u32 %s159, 1
        %s465 = scalar_lea.vmem [#allocation13], %s464
        // Predicated region
        $region73: #{_decoder_pallas.1} parent=51 // pred_check
          %p466 = pneg %p172
        $region74: #{_decoder_pallas.1} parent=51 // pred_check_branch
          %468 = sbr.rel (%p466) target = $region76
        $region75: #{_decoder_pallas.1} parent=51 // pred_region
          %470 = dma.done %s463, 16
        $region76: #{_decoder_pallas.1} parent=51 // pred_fallthru
          _
        %s471 = sand.u32 %s31, 1
        %s472 = scalar_lea.sflag [#allocation6], %s471
        %s473 = sand.u32 %s189, 1
        %s474 = scalar_lea.vmem [#allocation14], %s473
        // Predicated region
        $region77: #{_decoder_pallas.1} parent=51 // pred_check
          %p475 = pneg %p202
        $region78: #{_decoder_pallas.1} parent=51 // pred_check_branch
          %477 = sbr.rel (%p475) target = $region80
        $region79: #{_decoder_pallas.1} parent=51 // pred_region
          %479 = dma.done %s472, 16
        $region80: #{_decoder_pallas.1} parent=51 // pred_fallthru
          _
        %s480 = sand.u32 %s31, 1
        %s481 = scalar_lea.sflag [#allocation6], %s480
        %s482 = sand.u32 %s219, 1
        %s483 = scalar_lea.vmem [#allocation15], %s482
        // Predicated region
        $region81: #{_decoder_pallas.1} parent=51 // pred_check
          %p484 = pneg %p232
        $region82: #{_decoder_pallas.1} parent=51 // pred_check_branch
          %486 = sbr.rel (%p484) target = $region84
        $region83: #{_decoder_pallas.1} parent=51 // pred_region
          %488 = dma.done %s481, 16
        $region84: #{_decoder_pallas.1} parent=51 // pred_fallthru
          _
        %p489 = pneg %p47
        %p490 = pneg %p44
        %p491 = pneg %p68
        %p492 = pneg %p65
        %s493 = sand.u32 %s31, 1
        %s494 = scalar_lea.sflag [#allocation6], %s493
        %s495 = sand.u32 %s81, 1
        %s496 = smul.addr %s495, 32
        %s497 = scalar_lea.vmem [#allocation10], %s496
        %p498 = pneg %p94
        %p499 = pneg %p91
        %s500 = sand.u32 %s31, 1
        %s501 = scalar_lea.sflag [#allocation6], %s500
        %s502 = sand.u32 %s107, 1
        %s503 = scalar_lea.vmem [#allocation11], %s502
        %p504 = pneg %p120
        %p505 = pneg %p117
        %s506 = sand.u32 %s31, 1
        %s507 = scalar_lea.sflag [#allocation6], %s506
        %s508 = sand.u32 %s133, 1
        %s509 = smul.addr %s508, 32
        %s510 = scalar_lea.vmem [#allocation12], %s509
        %p511 = pneg %p146
        %p512 = pneg %p143
        %s513 = sand.u32 %s31, 1
        %s514 = scalar_lea.sflag [#allocation6], %s513
        %s515 = sand.u32 %s159, 1
        %s516 = scalar_lea.vmem [#allocation13], %s515
        %p517 = pneg %p172
        %p518 = pneg %p169
        %s519 = sand.u32 %s31, 1
        %s520 = scalar_lea.sflag [#allocation6], %s519
        %s521 = sand.u32 %s189, 1
        %s522 = scalar_lea.vmem [#allocation14], %s521
        %p523 = pneg %p202
        %p524 = pneg %p199
        %s525 = sand.u32 %s31, 1
        %s526 = scalar_lea.sflag [#allocation6], %s525
        %s527 = sand.u32 %s219, 1
        %s528 = scalar_lea.vmem [#allocation15], %s527
        %p529 = pneg %p232
        %p530 = pneg %p229
        %p531 = pneg %p253
        %p532 = pneg %p250
        %p533 = scmp.lt.s32.totalorder %s31, 3
        %s534 = scalar_select %p533, %s31, 3
        %p535 = scmp.lt.s32.totalorder %s31, 3
        %s536 = scalar_select %p535, %s31, 3
        %p537 = scmp.eq.s32.totalorder %s31, 0
        // Predicated region
        $region85: #{_decoder_pallas.1} parent=51 // pred_check
          %p538 = pneg %p537
        $region86: #{_decoder_pallas.1} parent=51 // pred_check_branch
          %540 = sbr.rel (%p538) target = $region88
        $region87: #{_decoder_pallas.1} parent=51 // pred_region
          %v541 = vld [vmem:[#allocation5] sm:$0xff]
          %v542 = vld [vmem:[#allocation5 + $0x8] sm:$0xff]
          %v543 = vld [vmem:[#allocation5 + $0x10] sm:$0xff]
          %vm544 = vcmask 261120
          %545 = vst.msk [vmem:[#allocation2] sm:$0xff] %vm544, %v541
          %546 = vst.msk [vmem:[#allocation2 + $0x8] sm:$0xff] %vm544, %v542
          %547 = vst.msk [vmem:[#allocation2 + $0x10] sm:$0xff] %vm544, %v543
        $region88: #{_decoder_pallas.1} parent=51 // pred_fallthru
          _
        %v548 = vld [vmem:[#allocation2] sm:$0xff]
        %v549 = vld [vmem:[#allocation2 + $0x8] sm:$0xff]
        %v550 = vld [vmem:[#allocation2 + $0x10] sm:$0xff]
        %v551 = vld [vmem:[#allocation8] sm:$0xff]
        %v552 = vld [vmem:[#allocation8 + $0x8] sm:$0xff]
        %v553 = vld [vmem:[#allocation8 + $0x10] sm:$0xff]
        %vm554 = vcmask 195584
        %v556 = vsel %vm554, %v551, 0
        %v559 = vsel %vm554, %v552, 0
        %v562 = vsel %vm554, %v553, 0
        %564 = vmatpush.msra.mxu0 0.0
        %565 = vmatpush.msra.mxu0 0.0
        %566 = vmatpush.msra.mxu0 0.0
        %567 = vmatpush.msra.mxu0 0.0
        %568 = vmatpush.msra.mxu0 0.0
        %569 = vmatpush.msra.mxu0 0.0
        %570 = vmatpush.msra.mxu0 0.0
        %571 = vmatpush.msra.mxu0 0.0
        %572 = vmatpush.msra.mxu0 0.0
        %573 = vmatpush.msra.mxu0 0.0
        %574 = vmatpush.msra.mxu0 0.0
        %575 = vmatpush.msra.mxu0 0.0
        %576 = vmatpush.msra.mxu0 0.0
        %577 = vmatpush.msra.mxu0 %v550
        %578 = vmatpush.msra.mxu0 %v549
        %579 = vmatpush.msra.mxu0 %v548
        %580 = vmatmul.f32.gmra.mxu0 %v556
        %v581 = vpop.f32.mrf.mxu0
        %v582 = vadd.f32 0.0, %v581
        %583 = vmatmul.f32.gmra.mxu0 %v559
        %v584 = vpop.f32.mrf.mxu0
        %v585 = vadd.f32 0.0, %v584
        %586 = vmatmul.f32.gmra.mxu0 %v562
        %v587 = vpop.f32.mrf.mxu0
        %v588 = vadd.f32 0.0, %v587
        %589 = vdwg.mxu0
        %v590 = vadd.f32 %v548, %v582
        %v591 = vadd.f32 %v549, %v585
        %v592 = vadd.f32 %v550, %v588
        %v593 = vld [vmem:[%s437] sm:$0xff]
        %v594 = vld [vmem:[%s437 + $0x8] sm:$0xff]
        %v595 = vld [vmem:[%s437 + $0x10] sm:$0xff]
        %v596 = vld [vmem:[%s437 + $0x18] sm:$0xff]
        %v597 = vld [vmem:[%s446] sm:$0x1]
        %v599 = vperm.slane %v597, 0
        %vm601 = vcmask 261120
        %v603 = vsel %vm601, %v590, 0
        %v606 = vsel %vm601, %v591, 0
        %v609 = vsel %vm601, %v592, 0
        %611 = vmatpush.msra.mxu0 0.0
        %612 = vmatpush.msra.mxu0 0.0
        %613 = vmatpush.msra.mxu0 0.0
        %614 = vmatpush.msra.mxu0 0.0
        %615 = vmatpush.msra.mxu0 0.0
        %616 = vmatpush.msra.mxu0 0.0
        %617 = vmatpush.msra.mxu0 0.0
        %618 = vmatpush.msra.mxu0 0.0
        %619 = vmatpush.msra.mxu0 0.0
        %620 = vmatpush.msra.mxu0 0.0
        %621 = vmatpush.msra.mxu0 0.0
        %622 = vmatpush.msra.mxu0 0.0
        %623 = vmatpush.msra.mxu0 %v596
        %624 = vmatpush.msra.mxu0 %v595
        %625 = vmatpush.msra.mxu0 %v594
        %626 = vmatpush.msra.mxu0 %v593
        %627 = vmatmul.f32.gmra.mxu0 %v603
        %v628 = vpop.f32.mrf.mxu0
        %v629 = vadd.f32 %v599, %v628
        %630 = vmatmul.f32.gmra.mxu0 %v606
        %v631 = vpop.f32.mrf.mxu0
        %v632 = vadd.f32 %v599, %v631
        %633 = vmatmul.f32.gmra.mxu0 %v609
        %v634 = vpop.f32.mrf.mxu0
        %v635 = vadd.f32 %v599, %v634
        %636 = vdwg.mxu0
        %v637 = vmax.f32 %v629, 0.0
        %v638 = vmax.f32 %v632, 0.0
        %v639 = vmax.f32 %v635, 0.0
        %v640 = vld [vmem:[%s456] sm:$0xff]
        %v641 = vld [vmem:[%s456 + $0x8] sm:$0xff]
        %v642 = vld [vmem:[%s456 + $0x10] sm:$0xff]
        %v643 = vld [vmem:[%s456 + $0x18] sm:$0xff]
        %v644 = vld [vmem:[%s465] sm:$0x1]
        %v646 = vperm.slane %v644, 0
        %v649 = vsel %vm601, %v637, 0
        %v652 = vsel %vm601, %v638, 0
        %v655 = vsel %vm601, %v639, 0
        %657 = vmatpush.msra.mxu0 0.0
        %658 = vmatpush.msra.mxu0 0.0
        %659 = vmatpush.msra.mxu0 0.0
        %660 = vmatpush.msra.mxu0 0.0
        %661 = vmatpush.msra.mxu0 0.0
        %662 = vmatpush.msra.mxu0 0.0
        %663 = vmatpush.msra.mxu0 0.0
        %664 = vmatpush.msra.mxu0 0.0
        %665 = vmatpush.msra.mxu0 0.0
        %666 = vmatpush.msra.mxu0 0.0
        %667 = vmatpush.msra.mxu0 0.0
        %668 = vmatpush.msra.mxu0 0.0
        %669 = vmatpush.msra.mxu0 %v643
        %670 = vmatpush.msra.mxu0 %v642
        %671 = vmatpush.msra.mxu0 %v641
        %672 = vmatpush.msra.mxu0 %v640
        %673 = vmatmul.f32.gmra.mxu0 %v649
        %v674 = vpop.f32.mrf.mxu0
        %v675 = vadd.f32 %v646, %v674
        %676 = vmatmul.f32.gmra.mxu0 %v652
        %v677 = vpop.f32.mrf.mxu0
        %v678 = vadd.f32 %v646, %v677
        %679 = vmatmul.f32.gmra.mxu0 %v655
        %v680 = vpop.f32.mrf.mxu0
        %v681 = vadd.f32 %v646, %v680
        %682 = vdwg.mxu0
        %v683 = vmax.f32 %v675, 0.0
        %v684 = vmax.f32 %v678, 0.0
        %v685 = vmax.f32 %v681, 0.0
        %686 = vst.msk [vmem:[#allocation2] sm:$0xff] %vm601, %v683
        %687 = vst.msk [vmem:[#allocation2 + $0x8] sm:$0xff] %vm601, %v684
        %688 = vst.msk [vmem:[#allocation2 + $0x10] sm:$0xff] %vm601, %v685
        %s689 = sld [smem:[#allocation4 + %s31]]
        %p690 = scmp.ne.s32.totalorder %s689, 0
        // Predicated region
        $region89: #{_decoder_pallas.1} parent=51 // pred_check
          %p691 = pneg %p690
        $region90: #{_decoder_pallas.1} parent=51 // pred_check_branch
          %693 = sbr.rel (%p691) target = $region92
        $region91: #{_decoder_pallas.1} parent=51 // pred_region
          %v694 = vld [vmem:[#allocation2] sm:$0xff]
          %v695 = vld [vmem:[#allocation2 + $0x8] sm:$0xff]
          %v696 = vld [vmem:[#allocation2 + $0x10] sm:$0xff]
          %v697 = vsel %vm601, %v694, 0.0
          %v698 = vsel %vm601, %v695, 0.0
          %v699 = vadd.f32 %v697, %v698
          %v700 = vsel %vm601, %v696, 0.0
          %v701 = vadd.f32 %v699, %v700
          %v702 = vrot.slane %v701, 4
          %v703 = vadd.f32 %v701, %v702
          %v704 = vrot.slane %v703, 2
          %v705 = vadd.f32 %v703, %v704
          %v706 = vrot.slane %v705, 1
          %v707 = vadd.f32 %v705, %v706
          %v708 = vrcp.pop 24.0
          %v709 = vmul.f32 24.0, %v708
          %v710 = vsub.f32 1.0, %v709
          %v711 = vmul.f32 %v708, %v710
          %v712 = vadd.f32 %v708, %v711
          %vm713 = vweird.f32 %v708
          %v714 = vsel %vm713, %v708, %v712
          %v715 = vmul.f32 %v707, %v714
          %v716 = vmul.f32 %v694, %v694
          %v717 = vmul.f32 %v695, %v695
          %v718 = vmul.f32 %v696, %v696
          %v719 = vsel %vm601, %v716, 0.0
          %v720 = vsel %vm601, %v717, 0.0
          %v721 = vadd.f32 %v719, %v720
          %v722 = vsel %vm601, %v718, 0.0
          %v723 = vadd.f32 %v721, %v722
          %v724 = vrot.slane %v723, 4
          %v725 = vadd.f32 %v723, %v724
          %v726 = vrot.slane %v725, 2
          %v727 = vadd.f32 %v725, %v726
          %v728 = vrot.slane %v727, 1
          %v729 = vadd.f32 %v727, %v728
          %v730 = vmul.f32 %v729, %v714
          %v731 = vmul.f32 %v715, %v715
          %v732 = vsub.f32 %v730, %v731
          %v733 = vmax.f32 %v732, 0.0
          %v734 = vld [vmem:[%s474] sm:$0x1]
          %v735 = vsub.f32 %v694, %v715
          %v736 = vsub.f32 %v695, %v715
          %v737 = vsub.f32 %v696, %v715
          %v739 = vperm.slane %v734, 0
          %v741 = vmul.f32 %v739, %v735
          %v742 = vmul.f32 %v739, %v736
          %v743 = vmul.f32 %v739, %v737
          %v744 = vadd.f32 %v733, 1e-05
          %v745 = vrsqrt.pop %v744
          %v746 = vmul.f32 %v745, %v744
          %v747 = vmul.f32 %v746, %v745
          %v748 = vmul.f32 0.5, %v747
          %v749 = vsub.f32 1.5, %v748
          %v750 = vmul.f32 %v745, %v749
          %vm751 = vweird.f32 %v744
          %vm752 = vweird.f32 %v745
          %vm753 = vmor %vm751, %vm752
          %v754 = vsel %vm753, %v745, %v750
          %v755 = vmul.f32 %v741, %v754
          %v756 = vmul.f32 %v742, %v754
          %v757 = vmul.f32 %v743, %v754
          %v758 = vld [vmem:[%s483] sm:$0x1]
          %v760 = vperm.slane %v758, 0
          %v762 = vadd.f32 %v755, %v760
          %v763 = vadd.f32 %v756, %v760
          %v764 = vadd.f32 %v757, %v760
          %765 = vst.msk [vmem:[#allocation2] sm:$0xff] %vm601, %v762
          %766 = vst.msk [vmem:[#allocation2 + $0x8] sm:$0xff] %vm601, %v763
          %767 = vst.msk [vmem:[#allocation2 + $0x10] sm:$0xff] %vm601, %v764
        $region92: #{_decoder_pallas.1} parent=51 // pred_fallthru
          _
        %p768 = scmp.eq.s32.totalorder %s31, 4
        // Predicated region
        $region93: #{_decoder_pallas.1} parent=51 // pred_check
          %p769 = pneg %p768
        $region94: #{_decoder_pallas.1} parent=51 // pred_check_branch
          %771 = sbr.rel (%p769) target = $region96
        $region95: #{_decoder_pallas.1} parent=51 // pred_region
          %v772 = vld [vmem:[#allocation2] sm:$0xff]
          %v773 = vld [vmem:[#allocation2 + $0x8] sm:$0xff]
          %v774 = vld [vmem:[#allocation2 + $0x10] sm:$0xff]
          %775 = vst.msk [vmem:[#allocation16] sm:$0xff] %vm601, %v772
          %776 = vst.msk [vmem:[#allocation16 + $0x8] sm:$0xff] %vm601, %v773
          %777 = vst.msk [vmem:[#allocation16 + $0x10] sm:$0xff] %vm601, %v774
        $region96: #{_decoder_pallas.1} parent=51 // pred_fallthru
          _
        // Predicated region
        $region97: #{_decoder_pallas.1} parent=51 // pred_check
          %p778 = pneg %p250
        $region98: #{_decoder_pallas.1} parent=51 // pred_check_branch
          %780 = sbr.rel (%p778) target = $region100
        $region99: #{_decoder_pallas.1} parent=51 // pred_region
          %782 = vsyncadd [#allocation7], 0
          %s783 = sshll.u32 [#allocation16], 4
          %s784 = int_to_ptr.vmem [resolvable:$true] %s783
          %s785 = sshll.u32 %s9, 4
          %s786 = int_to_ptr.hbm [resolvable:$true] %s785
          %791 = dma.vmem_to_hbm [thread:$0]  %s784, 384, %s786, [#allocation7], 128, 128, 8
        $region100: #{_decoder_pallas.1} parent=51 // pred_fallthru
          _
        // Predicated region
        $region101: #{_decoder_pallas.1} parent=51 // pred_check
          %p792 = pneg %p250
        $region102: #{_decoder_pallas.1} parent=51 // pred_check_branch
          %794 = sbr.rel (%p792) target = $region104
        $region103: #{_decoder_pallas.1} parent=51 // pred_region
          %796 = dma.done [#allocation7], 384
        $region104: #{_decoder_pallas.1} parent=51 // pred_fallthru
          _
      $region52: #{_decoder_pallas.1} parent=5 // pred_fallthru
        _
      %p797 = scmp.le.s32.totalorder 2, %s26
      // Predicated region
      $region105: #{_decoder_pallas.1} parent=5 // pred_check
        %p798 = pneg %p797
      $region106: #{_decoder_pallas.1} parent=5 // pred_check_branch
        %800 = sbr.rel (%p798) target = $region108
      $region107: #{_decoder_pallas.1} parent=5 // pred_region
        %s801 = ssub.s32 %s26, 2
      $region108: #{_decoder_pallas.1} parent=5 // pred_fallthru
        _
    $region6: #{_decoder_pallas.1} parent=1 // loop_footer
      %s30 = sadd.s32 1, %s26
    $region7: #{_decoder_pallas.1} parent=1 // loop_footer_branch
      %25 = sbr.rel target = $region3
    $region8: #{_decoder_pallas.1} parent=1 // loop_exit
      _
    %802 = vsyncpa [#allocation6], 1
    %s803 = scalar_lea.sflag [#allocation6], 1
    %804 = vsyncpa %s803, 1
    %805 = vsyncpa [#allocation9], 1
    %806 = vsyncpa [#allocation7], 1
    %s807 = scalar_lea.sflag [#allocation7], 1
    %808 = vsyncpa %s807, 1

</llo_original>
